<compile_context>
chip_gen: v6e
topology: v6e:2x2x1
jax: 0.10.0
libtpu: 0.0.40
codegen_flags: <defaults>
</compile_context>

<pallas_src>
import jax
import jax.numpy as jnp
import numpy as np
from jax.experimental import pallas as pl
from jax.experimental.pallas import tpu as pltpu

INPUT_SIZE = 768      # BERT-base hidden size feeding the head
HIDDEN_SIZE = 32
NUM_LABELS = 5
NUM_TASK = 3
VOCAB = 100
BATCH = 2
SEQ = 8

HID_FOLD = NUM_TASK * HIDDEN_SIZE           # 96  (tasks folded into N of matmul 1)
OUT_FOLD = NUM_TASK * NUM_LABELS            # 15  (tasks folded into N of matmul 2)
LANE = 128
SUBLANE = 8
HID_PAD = ((HID_FOLD + LANE - 1) // LANE) * LANE    # 128 -> lane-dense
OUT_PAD = ((OUT_FOLD + LANE - 1) // LANE) * LANE    # 128 -> lane-dense


def _round_up(x, m):
    return ((x + m - 1) // m) * m


# ----------------------------------------------------------------------------
# Pallas kernel: fully fused multi-task MLP head (single invocation, no grid)
# ----------------------------------------------------------------------------
def _personality_head_kernel(x_ref, w1_ref, b1_ref, w2_ref, b2_ref, o_ref):
    # x_ref : (MPAD, INPUT_SIZE)    f32  -- CLS features (rows zero-padded to 8)
    # w1_ref: (INPUT_SIZE, HID_PAD) bf16 -- all tasks' dense weights, zero-padded
    # b1_ref: (1, HID_PAD)          f32
    # w2_ref: (HID_PAD, OUT_PAD)    bf16 -- block-diagonal out_proj, zero-padded
    # b2_ref: (1, OUT_PAD)          f32
    # o_ref : (MPAD, OUT_PAD)       f32  -- lane-dense, sublane-full output slab
    x = x_ref[...].astype(jnp.bfloat16)            # in-kernel cast (free VPU slot)
    h = jnp.dot(x, w1_ref[...], preferred_element_type=jnp.float32)
    h = jnp.maximum(h + b1_ref[...], 0.0)          # bias + ReLU in f32 (v5e-safe)
    # nn.Dropout in eval mode == identity (see header note)
    out = jnp.dot(h.astype(jnp.bfloat16), w2_ref[...],
                  preferred_element_type=jnp.float32)
    o_ref[...] = out + b2_ref[...]


def personality_head_pallas(cls_feat, w1_fold, b1_fold, w2_fold, b2_fold):
    """cls_feat: (B, INPUT_SIZE) f32 (no wrapper-side cast).  Returns the
    lane-dense (B, OUT_PAD) f32 logit slab (unfold done by the caller)."""
    b = cls_feat.shape[0]
    m_pad = _round_up(max(b, SUBLANE), SUBLANE)    # full sublane granule
    x = cls_feat if m_pad == b else jnp.pad(cls_feat, ((0, m_pad - b), (0, 0)))

    vmem_spec = pl.BlockSpec(memory_space=pltpu.MemorySpace.VMEM)
    flops = 2 * m_pad * INPUT_SIZE * HID_PAD + 2 * m_pad * HID_PAD * OUT_PAD
    bytes_accessed = (m_pad * INPUT_SIZE * 4           # x (f32)
                      + INPUT_SIZE * HID_PAD * 2       # W1 (bf16)
                      + HID_PAD * 4                    # b1 (f32)
                      + HID_PAD * OUT_PAD * 2          # W2 (bf16)
                      + OUT_PAD * 4                    # b2 (f32)
                      + m_pad * OUT_PAD * 4)           # out (f32)

    slab = pl.pallas_call(
        _personality_head_kernel,
        out_shape=jax.ShapeDtypeStruct((m_pad, OUT_PAD), jnp.float32),
        in_specs=[vmem_spec, vmem_spec, vmem_spec, vmem_spec, vmem_spec],
        out_specs=vmem_spec,
        cost_estimate=pl.CostEstimate(flops=flops, transcendentals=0,
                                      bytes_accessed=bytes_accessed),
    )(x, w1_fold, b1_fold, w2_fold, b2_fold)
    return slab[:b]


# ----------------------------------------------------------------------------
# Parameter construction (mimics nn.Linear init shapes) + kernel-ready fold
# ----------------------------------------------------------------------------
def fold_head_params(w1, b1, w2, b2):
    """Fold per-task Linear params into lane-dense single-matmul operands.

    w1: (T, D, H), b1: (T, H), w2: (T, H, L), b2: (T, L); all f32, (in, out)
    layout (i.e. already transposed relative to PyTorch's Linear.weight).
    """
    d = w1.shape[1]
    # (T, D, H) -> (D, T*H), zero-pad N to 128 lanes.
    w1_fold = jnp.transpose(w1, (1, 0, 2)).reshape(d, HID_FOLD)
    w1_fold = jnp.pad(w1_fold, ((0, 0), (0, HID_PAD - HID_FOLD)))
    b1_fold = jnp.pad(b1.reshape(HID_FOLD), (0, HID_PAD - HID_FOLD)).reshape(1, HID_PAD)

    # Block-diagonal (T*H, T*L) so each task only sees its own hidden slice.
    w2_bd = jnp.zeros((HID_FOLD, OUT_FOLD), jnp.float32)
    for t in range(NUM_TASK):
        w2_bd = w2_bd.at[t * HIDDEN_SIZE:(t + 1) * HIDDEN_SIZE,
                         t * NUM_LABELS:(t + 1) * NUM_LABELS].set(w2[t])
    w2_fold = jnp.pad(w2_bd, ((0, HID_PAD - HID_FOLD), (0, OUT_PAD - OUT_FOLD)))
    b2_fold = jnp.pad(b2.reshape(OUT_FOLD), (0, OUT_PAD - OUT_FOLD)).reshape(1, OUT_PAD)

    return {
        "w1_fold": w1_fold.astype(jnp.bfloat16),   # MXU operand -> bf16 storage
        "b1_fold": b1_fold.astype(jnp.float32),    # bias stays f32
        "w2_fold": w2_fold.astype(jnp.bfloat16),
        "b2_fold": b2_fold.astype(jnp.float32),
    }


def init_params(key):
    keys = jax.random.split(key, 3)
    # Embedding table for the synthetic encoder stand-in.
    emb = jax.random.normal(keys[0], (VOCAB, INPUT_SIZE), jnp.float32) * 0.02

    def linear_init(k, fan_in, fan_out):
        bound = 1.0 / np.sqrt(fan_in)
        kw, kb = jax.random.split(k)
        w = jax.random.uniform(kw, (fan_in, fan_out), jnp.float32, -bound, bound)
        b = jax.random.uniform(kb, (fan_out,), jnp.float32, -bound, bound)
        return w, b

    w1_list, b1_list, w2_list, b2_list = [], [], [], []
    k_dense = jax.random.split(keys[1], NUM_TASK)
    k_proj = jax.random.split(keys[2], NUM_TASK)
    for t in range(NUM_TASK):
        w1, b1 = linear_init(k_dense[t], INPUT_SIZE, HIDDEN_SIZE)
        w2, b2 = linear_init(k_proj[t], HIDDEN_SIZE, NUM_LABELS)
        w1_list.append(w1); b1_list.append(b1)
        w2_list.append(w2); b2_list.append(b2)

    params = {
        "embedding": emb,
        "w1": jnp.stack(w1_list),   # (T, D, H)  -- kept for the reference check
        "b1": jnp.stack(b1_list),   # (T, H)
        "w2": jnp.stack(w2_list),   # (T, H, L)
        "b2": jnp.stack(b2_list),   # (T, L)
    }
    params.update(fold_head_params(params["w1"], params["b1"],
                                   params["w2"], params["b2"]))
    return params


# ----------------------------------------------------------------------------
# Full PersonalityEncoder forward
# ----------------------------------------------------------------------------
@jax.jit
def personality_encoder_core(params, input_ids, attention_mask):
    """Jitted hot path: CLS-only gather + fused Pallas head -> dense slab."""
    # --- synthetic encoder stand-in (see TODO(synk) at top): gather ONLY the
    #     CLS position; never materialize the (B, S, 768) sequence output.
    cls_ids = input_ids[:, 0]                                          # (B,)
    cls_mask = attention_mask[:, 0].astype(jnp.float32)                # (B,)
    cls_feat = params["embedding"][cls_ids] * cls_mask[:, None]        # (B, 768) f32

    # --- PersonalityHead (single fused Pallas kernel), lane-dense slab out ---
    return personality_head_pallas(
        cls_feat, params["w1_fold"], params["b1_fold"],
        params["w2_fold"], params["b2_fold"])                          # (B, OUT_PAD)


def personality_encoder_forward(params, input_ids, attention_mask):
    slab = personality_encoder_core(params, input_ids, attention_mask)
    # Unfold once at the edge (outside the jitted hot path); columns are
    # ordered task-major (t*NUM_LABELS + l).  PyTorch head returns a list.
    out = slab[:, :OUT_FOLD].reshape(-1, NUM_TASK, NUM_LABELS)
    return [out[:, t, :] for t in range(NUM_TASK)]


# ----------------------------------------------------------------------------
# References for correctness checks
# ----------------------------------------------------------------------------
def personality_head_mirror(cls_feat, w1_fold, b1_fold, w2_fold, b2_fold):
    """Plain-JAX mirror of the exact kernel math (bf16 operands, f32 accum)."""
    x = cls_feat.astype(jnp.bfloat16)
    h = jnp.dot(x, w1_fold, preferred_element_type=jnp.float32) + b1_fold
    h = jnp.maximum(h, 0.0)
    out = jnp.dot(h.astype(jnp.bfloat16), w2_fold,
                  preferred_element_type=jnp.float32) + b2_fold
    out = out[:, :OUT_FOLD].reshape(-1, NUM_TASK, NUM_LABELS)
    return jnp.transpose(out, (1, 0, 2))


def personality_head_reference_f32(params, cls_feat):
    """Per-task full-f32 reference == the PyTorch module's math."""
    outs = []
    for t in range(NUM_TASK):
        h = jnp.maximum(cls_feat @ params["w1"][t] + params["b1"][t], 0.0)
        outs.append(h @ params["w2"][t] + params["b2"][t])
    return outs


if __name__ == "__main__":
    key = jax.random.PRNGKey(0)
    k_param, k_ids = jax.random.split(key)

    params = init_params(k_param)

    input_ids = jax.random.randint(k_ids, (BATCH, SEQ), 0, VOCAB, dtype=jnp.int32)
    attention_mask = jnp.ones((BATCH, SEQ), dtype=jnp.int32)

    logits = personality_encoder_forward(params, input_ids, attention_mask)
    logits = [jax.block_until_ready(x) for x in logits]

    # Rebuild the CLS features exactly as the forward does (CLS-only gather).
    cls_feat = (params["embedding"][input_ids[:, 0]]
                * attention_mask[:, 0].astype(jnp.float32)[:, None])

    # (1) Tight check vs an exact-math mirror (same bf16 operands, f32 accum).
    mirror = personality_head_mirror(
        cls_feat, params["w1_fold"], params["b1_fold"],
        params["w2_fold"], params["b2_fold"])
    for t in range(NUM_TASK):
        np.testing.assert_allclose(np.asarray(logits[t]), np.asarray(mirror[t]),
                                   rtol=1e-5, atol=1e-5)

    # (2) Semantic check vs the per-task full-f32 PyTorch-equivalent reference
    #     (loose tolerance accounts for bf16 MXU operand storage).
    ref = personality_head_reference_f32(params, cls_feat)
    for got, want in zip(logits, ref):
        np.testing.assert_allclose(np.asarray(got), np.asarray(want),
                                   rtol=2e-2, atol=2e-3)

    assert len(logits) == NUM_TASK
    assert logits[0].shape == (BATCH, NUM_LABELS)

    print("KERNEL_OK")
</pallas_src>

<mosaic_0001>
module attributes {stable_mosaic.version = 11 : i64} {
  func.func @_personality_head_kernel(%arg0: memref<8x768xf32, #tpu.memory_space<vmem>>, %arg1: memref<768x128xbf16, #tpu.memory_space<vmem>>, %arg2: memref<1x128xf32, #tpu.memory_space<vmem>>, %arg3: memref<128x128xbf16, #tpu.memory_space<vmem>>, %arg4: memref<1x128xf32, #tpu.memory_space<vmem>>, %arg5: memref<8x128xf32, #tpu.memory_space<vmem>>) attributes {dimension_semantics = [], scalar_prefetch = 0 : i64, scratch_operands = 0 : i64, tpu.core_type = #tpu.core_type<tc>} {
    %c0 = arith.constant 0 : index
    %c0_0 = arith.constant 0 : index
    %0 = vector.load %arg0[%c0, %c0_0] : memref<8x768xf32, #tpu.memory_space<vmem>>, vector<8x768xf32>
    %1 = arith.truncf %0 : vector<8x768xf32> to vector<8x768xbf16>
    %c0_1 = arith.constant 0 : index
    %c0_2 = arith.constant 0 : index
    %2 = vector.load %arg1[%c0_1, %c0_2] : memref<768x128xbf16, #tpu.memory_space<vmem>>, vector<768x128xbf16>
    %cst = arith.constant dense<0.000000e+00> : vector<8x128xf32>
    %3 = tpu.matmul %1, %2, %cst {dimension_numbers = #tpu.dot_dimension_numbers<[1], [0], [0], [1], [0, 0, 1, 1], [], []>} : vector<8x768xbf16>, vector<768x128xbf16>, vector<8x128xf32> -> vector<8x128xf32>
    %c0_3 = arith.constant 0 : index
    %c0_4 = arith.constant 0 : index
    %4 = vector.load %arg2[%c0_3, %c0_4] : memref<1x128xf32, #tpu.memory_space<vmem>>, vector<1x128xf32>
    %5 = vector.broadcast %4 : vector<1x128xf32> to vector<8x128xf32>
    %6 = arith.addf %3, %5 : vector<8x128xf32>
    %cst_5 = arith.constant 0.000000e+00 : f32
    %7 = vector.broadcast %cst_5 : f32 to vector<8x128xf32>
    %8 = arith.maximumf %6, %7 : vector<8x128xf32>
    %9 = arith.truncf %8 : vector<8x128xf32> to vector<8x128xbf16>
    %c0_6 = arith.constant 0 : index
    %c0_7 = arith.constant 0 : index
    %10 = vector.load %arg3[%c0_6, %c0_7] : memref<128x128xbf16, #tpu.memory_space<vmem>>, vector<128x128xbf16>
    %cst_8 = arith.constant dense<0.000000e+00> : vector<8x128xf32>
    %11 = tpu.matmul %9, %10, %cst_8 {dimension_numbers = #tpu.dot_dimension_numbers<[1], [0], [0], [1], [0, 0, 1, 1], [], []>} : vector<8x128xbf16>, vector<128x128xbf16>, vector<8x128xf32> -> vector<8x128xf32>
    %c0_9 = arith.constant 0 : index
    %c0_10 = arith.constant 0 : index
    %12 = vector.load %arg4[%c0_9, %c0_10] : memref<1x128xf32, #tpu.memory_space<vmem>>, vector<1x128xf32>
    %13 = vector.broadcast %12 : vector<1x128xf32> to vector<8x128xf32>
    %14 = arith.addf %11, %13 : vector<8x128xf32>
    %c0_11 = arith.constant 0 : index
    %c0_12 = arith.constant 0 : index
    %15 = vector.load %arg5[%c0_11, %c0_12] : memref<8x128xf32, #tpu.memory_space<vmem>>, vector<8x128xf32>
    tpu.vector_store %arg5[%c0_11, %c0_12], %14 {strides = array<i32>} : memref<8x128xf32, #tpu.memory_space<vmem>>, vector<8x128xf32>,
    return
  }
}

</mosaic_0001>

<llo_original>
// kernel: personality_encoder_core.1
$region0: #{personality_encoder_core.1}
  #allocation0 [shape = 'u32[]', space=smem, size = 0x4, offset = 0x4, fixed_abs, tag = 'smem constant byte address 0x4 - core index']
  #allocation1 [shape = 'u32[144,128]{1,0:T(1,128)}', space=vmem, size = 0x12000, scoped, tag = 'internal scratch']
  %s0 = inlined_call_operand.vmem [shape: f32[8,768], index: 0, kind: input, shape index: {}]
  %s1 = inlined_call_operand.hbm [shape: bf16[768,128], index: 1, kind: input, shape index: {}]
  %s2 = inlined_call_operand.vmem [shape: f32[1,128], index: 2, kind: input, shape index: {}]
  %s3 = inlined_call_operand.vmem [shape: bf16[128,128], index: 3, kind: input, shape index: {}]
  %s4 = inlined_call_operand.vmem [shape: f32[1,128], index: 4, kind: input, shape index: {}]
  %s5 = inlined_call_operand.vmem [shape: f32[8,128], index: 5, kind: output, shape index: {}]
  %s6 = sld [smem:[#allocation0]]
  $region34: #{personality_encoder_core.1} parent=0
    _
  %s8 = ssub.s32 1, %s6
  %s9 = scalar_select 0, %s8, %s6
  $region1: #{personality_encoder_core.1} parent=0
    #allocation2 [shape = 'u8[196608]{0}', space=vmem, size = 0x30000, scoped, tag = 'input window, operand 1, single buffered']
    #allocation3 [shape = 's32[1]{0}', space=sflag, size = 0x4, scoped, tag = 'scoped memory for personality_encoder_core.1']
    %10 = vsyncpa [#allocation3], 0
    // Predicated region
    $region2: #{personality_encoder_core.1} parent=1 // pred_check
      _
    $region3: #{personality_encoder_core.1} parent=1 // pred_check_branch
      %12 = sbr.rel (0) target = $region5
    $region4: #{personality_encoder_core.1} parent=1 // pred_region
      _
    $region5: #{personality_encoder_core.1} parent=1 // pred_fallthru
      _
    // Predicated region
    $region6: #{personality_encoder_core.1} parent=1 // pred_check
      _
    $region7: #{personality_encoder_core.1} parent=1 // pred_check_branch
      %14 = sbr.rel (0) target = $region9
    $region8: #{personality_encoder_core.1} parent=1 // pred_region
      %s16 = ssub.s32 6144, 6144
      %17 = vsyncadd [#allocation3], %s16
      %s18 = sshll.u32 [#allocation2], 4
      %s19 = int_to_ptr.vmem [resolvable:$true] %s18
      %24 = dma.hbm_to_vmem [thread:$0]  %s1, 6144, %s19, [#allocation3], 64, 64, 4
    $region9: #{personality_encoder_core.1} parent=1 // pred_fallthru
      _
    // Predicated region
    $region10: #{personality_encoder_core.1} parent=1 // pred_check
      _
    $region11: #{personality_encoder_core.1} parent=1 // pred_check_branch
      %26 = sbr.rel (0) target = $region13
    $region12: #{personality_encoder_core.1} parent=1 // pred_region
      _
    $region13: #{personality_encoder_core.1} parent=1 // pred_fallthru
      _
    // Predicated region
    $region14: #{personality_encoder_core.1} parent=1 // pred_check
      _
    $region15: #{personality_encoder_core.1} parent=1 // pred_check_branch
      %28 = sbr.rel (0) target = $region17
    $region16: #{personality_encoder_core.1} parent=1 // pred_region
      _
    $region17: #{personality_encoder_core.1} parent=1 // pred_fallthru
      _
    // Predicated region
    $region18: #{personality_encoder_core.1} parent=1 // pred_check
      _
    $region19: #{personality_encoder_core.1} parent=1 // pred_check_branch
      %30 = sbr.rel (0) target = $region21
    $region20: #{personality_encoder_core.1} parent=1 // pred_region
      _
    $region21: #{personality_encoder_core.1} parent=1 // pred_fallthru
      _
    // Predicated region
    $region22: #{personality_encoder_core.1} parent=1 // pred_check
      _
    $region23: #{personality_encoder_core.1} parent=1 // pred_check_branch
      %32 = sbr.rel (0) target = $region25
    $region24: #{personality_encoder_core.1} parent=1 // pred_region
      %33 = dma.done [#allocation3], 6144
    $region25: #{personality_encoder_core.1} parent=1 // pred_fallthru
      _
    %v35 = vld [vmem:[%s0] sm:$0xff]
    %v36 = vld [vmem:[%s0 + $0x8] sm:$0xff]
    %v37 = vld [vmem:[%s0 + $0x10] sm:$0xff]
    %v38 = vld [vmem:[%s0 + $0x18] sm:$0xff]
    %v39 = vld [vmem:[%s0 + $0x20] sm:$0xff]
    %v40 = vld [vmem:[%s0 + $0x28] sm:$0xff]
    %v41 = vpack.c.bf16 %v35, %v35
    %v42 = vpack.c.bf16 %v36, %v36
    %v43 = vpack.c.bf16 %v37, %v37
    %v44 = vpack.c.bf16 %v38, %v38
    %v45 = vpack.c.bf16 %v39, %v39
    %v46 = vpack.c.bf16 %v40, %v40
    %v47 = vld [vmem:[#allocation2] sm:$0xf]
    %v48 = vld [vmem:[#allocation2 + $0x4] sm:$0xf]
    %v49 = vld [vmem:[#allocation2 + $0x8] sm:$0xf]
    %v50 = vld [vmem:[#allocation2 + $0xc] sm:$0xf]
    %v51 = vld [vmem:[#allocation2 + $0x10] sm:$0xf]
    %v52 = vld [vmem:[#allocation2 + $0x14] sm:$0xf]
    %v53 = vld [vmem:[#allocation2 + $0x18] sm:$0xf]
    %v54 = vld [vmem:[#allocation2 + $0x1c] sm:$0xf]
    %v55 = vld [vmem:[#allocation2 + $0x20] sm:$0xf]
    %v56 = vld [vmem:[#allocation2 + $0x24] sm:$0xf]
    %v57 = vld [vmem:[#allocation2 + $0x28] sm:$0xf]
    %v58 = vld [vmem:[#allocation2 + $0x2c] sm:$0xf]
    %v59 = vld [vmem:[#allocation2 + $0x30] sm:$0xf]
    %v60 = vld [vmem:[#allocation2 + $0x34] sm:$0xf]
    %v61 = vld [vmem:[#allocation2 + $0x38] sm:$0xf]
    %v62 = vld [vmem:[#allocation2 + $0x3c] sm:$0xf]
    %v63 = vld [vmem:[#allocation2 + $0x40] sm:$0xf]
    %v64 = vld [vmem:[#allocation2 + $0x44] sm:$0xf]
    %v65 = vld [vmem:[#allocation2 + $0x48] sm:$0xf]
    %v66 = vld [vmem:[#allocation2 + $0x4c] sm:$0xf]
    %v67 = vld [vmem:[#allocation2 + $0x50] sm:$0xf]
    %v68 = vld [vmem:[#allocation2 + $0x54] sm:$0xf]
    %v69 = vld [vmem:[#allocation2 + $0x58] sm:$0xf]
    %v70 = vld [vmem:[#allocation2 + $0x5c] sm:$0xf]
    %v71 = vld [vmem:[#allocation2 + $0x60] sm:$0xf]
    %v72 = vld [vmem:[#allocation2 + $0x64] sm:$0xf]
    %v73 = vld [vmem:[#allocation2 + $0x68] sm:$0xf]
    %v74 = vld [vmem:[#allocation2 + $0x6c] sm:$0xf]
    %v75 = vld [vmem:[#allocation2 + $0x70] sm:$0xf]
    %v76 = vld [vmem:[#allocation2 + $0x74] sm:$0xf]
    %v77 = vld [vmem:[#allocation2 + $0x78] sm:$0xf]
    %v78 = vld [vmem:[#allocation2 + $0x7c] sm:$0xf]
    %v79 = vld [vmem:[#allocation2 + $0x80] sm:$0xf]
    %v80 = vld [vmem:[#allocation2 + $0x84] sm:$0xf]
    %v81 = vld [vmem:[#allocation2 + $0x88] sm:$0xf]
    %v82 = vld [vmem:[#allocation2 + $0x8c] sm:$0xf]
    %v83 = vld [vmem:[#allocation2 + $0x90] sm:$0xf]
    %v84 = vld [vmem:[#allocation2 + $0x94] sm:$0xf]
    %v85 = vld [vmem:[#allocation2 + $0x98] sm:$0xf]
    %v86 = vld [vmem:[#allocation2 + $0x9c] sm:$0xf]
    %v87 = vld [vmem:[#allocation2 + $0xa0] sm:$0xf]
    %v88 = vld [vmem:[#allocation2 + $0xa4] sm:$0xf]
    %v89 = vld [vmem:[#allocation2 + $0xa8] sm:$0xf]
    %v90 = vld [vmem:[#allocation2 + $0xac] sm:$0xf]
    %v91 = vld [vmem:[#allocation2 + $0xb0] sm:$0xf]
    %v92 = vld [vmem:[#allocation2 + $0xb4] sm:$0xf]
    %v93 = vld [vmem:[#allocation2 + $0xb8] sm:$0xf]
    %v94 = vld [vmem:[#allocation2 + $0xbc] sm:$0xf]
    %v95 = vld [vmem:[#allocation2 + $0xc0] sm:$0xf]
    %v96 = vld [vmem:[#allocation2 + $0xc4] sm:$0xf]
    %v97 = vld [vmem:[#allocation2 + $0xc8] sm:$0xf]
    %v98 = vld [vmem:[#allocation2 + $0xcc] sm:$0xf]
    %v99 = vld [vmem:[#allocation2 + $0xd0] sm:$0xf]
    %v100 = vld [vmem:[#allocation2 + $0xd4] sm:$0xf]
    %v101 = vld [vmem:[#allocation2 + $0xd8] sm:$0xf]
    %v102 = vld [vmem:[#allocation2 + $0xdc] sm:$0xf]
    %v103 = vld [vmem:[#allocation2 + $0xe0] sm:$0xf]
    %v104 = vld [vmem:[#allocation2 + $0xe4] sm:$0xf]
    %v105 = vld [vmem:[#allocation2 + $0xe8] sm:$0xf]
    %v106 = vld [vmem:[#allocation2 + $0xec] sm:$0xf]
    %v107 = vld [vmem:[#allocation2 + $0xf0] sm:$0xf]
    %v108 = vld [vmem:[#allocation2 + $0xf4] sm:$0xf]
    %v109 = vld [vmem:[#allocation2 + $0xf8] sm:$0xf]
    %v110 = vld [vmem:[#allocation2 + $0xfc] sm:$0xf]
    %v111 = vld [vmem:[#allocation2 + $0x100] sm:$0xf]
    %v112 = vld [vmem:[#allocation2 + $0x104] sm:$0xf]
    %v113 = vld [vmem:[#allocation2 + $0x108] sm:$0xf]
    %v114 = vld [vmem:[#allocation2 + $0x10c] sm:$0xf]
    %v115 = vld [vmem:[#allocation2 + $0x110] sm:$0xf]
    %v116 = vld [vmem:[#allocation2 + $0x114] sm:$0xf]
    %v117 = vld [vmem:[#allocation2 + $0x118] sm:$0xf]
    %v118 = vld [vmem:[#allocation2 + $0x11c] sm:$0xf]
    %v119 = vld [vmem:[#allocation2 + $0x120] sm:$0xf]
    %v120 = vld [vmem:[#allocation2 + $0x124] sm:$0xf]
    %v121 = vld [vmem:[#allocation2 + $0x128] sm:$0xf]
    %v122 = vld [vmem:[#allocation2 + $0x12c] sm:$0xf]
    %v123 = vld [vmem:[#allocation2 + $0x130] sm:$0xf]
    %v124 = vld [vmem:[#allocation2 + $0x134] sm:$0xf]
    %v125 = vld [vmem:[#allocation2 + $0x138] sm:$0xf]
    %v126 = vld [vmem:[#allocation2 + $0x13c] sm:$0xf]
    %v127 = vld [vmem:[#allocation2 + $0x140] sm:$0xf]
    %v128 = vld [vmem:[#allocation2 + $0x144] sm:$0xf]
    %v129 = vld [vmem:[#allocation2 + $0x148] sm:$0xf]
    %v130 = vld [vmem:[#allocation2 + $0x14c] sm:$0xf]
    %v131 = vld [vmem:[#allocation2 + $0x150] sm:$0xf]
    %v132 = vld [vmem:[#allocation2 + $0x154] sm:$0xf]
    %v133 = vld [vmem:[#allocation2 + $0x158] sm:$0xf]
    %v134 = vld [vmem:[#allocation2 + $0x15c] sm:$0xf]
    %v135 = vld [vmem:[#allocation2 + $0x160] sm:$0xf]
    %v136 = vld [vmem:[#allocation2 + $0x164] sm:$0xf]
    %v137 = vld [vmem:[#allocation2 + $0x168] sm:$0xf]
    %v138 = vld [vmem:[#allocation2 + $0x16c] sm:$0xf]
    %v139 = vld [vmem:[#allocation2 + $0x170] sm:$0xf]
    %v140 = vld [vmem:[#allocation2 + $0x174] sm:$0xf]
    %v141 = vld [vmem:[#allocation2 + $0x178] sm:$0xf]
    %v142 = vld [vmem:[#allocation2 + $0x17c] sm:$0xf]
    %v143 = vld [vmem:[%s2] sm:$0x1]
    %v145 = vlaneseq
    %v146 = vshrl.u32 %v145, 7
    %v147 = vsub.s32 0, %v146
    %v148 = vrot.slane %v143, %v147
    %v246 = vunpack.c.l.b16 %v47
    %v247 = vunpack.c.l.b16 %v48
    %v248 = vunpack.c.l.b16 %v49
    %v249 = vunpack.c.l.b16 %v50
    %v250 = vunpack.c.l.b16 %v51
    %v251 = vunpack.c.l.b16 %v52
    %v252 = vunpack.c.l.b16 %v53
    %v253 = vunpack.c.l.b16 %v54
    %v254 = vunpack.c.l.b16 %v55
    %v255 = vunpack.c.l.b16 %v56
    %v256 = vunpack.c.l.b16 %v57
    %v257 = vunpack.c.l.b16 %v58
    %v258 = vunpack.c.l.b16 %v59
    %v259 = vunpack.c.l.b16 %v60
    %v260 = vunpack.c.l.b16 %v61
    %v261 = vunpack.c.l.b16 %v62
    %v262 = vunpack.c.l.b16 %v63
    %v263 = vunpack.c.l.b16 %v64
    %v264 = vunpack.c.l.b16 %v65
    %v265 = vunpack.c.l.b16 %v66
    %v266 = vunpack.c.l.b16 %v67
    %v267 = vunpack.c.l.b16 %v68
    %v268 = vunpack.c.l.b16 %v69
    %v269 = vunpack.c.l.b16 %v70
    %v270 = vunpack.c.l.b16 %v71
    %v271 = vunpack.c.l.b16 %v72
    %v272 = vunpack.c.l.b16 %v73
    %v273 = vunpack.c.l.b16 %v74
    %v274 = vunpack.c.l.b16 %v75
    %v275 = vunpack.c.l.b16 %v76
    %v276 = vunpack.c.l.b16 %v77
    %v277 = vunpack.c.l.b16 %v78
    %v278 = vunpack.c.l.b16 %v79
    %v279 = vunpack.c.l.b16 %v80
    %v280 = vunpack.c.l.b16 %v81
    %v281 = vunpack.c.l.b16 %v82
    %v282 = vunpack.c.l.b16 %v83
    %v283 = vunpack.c.l.b16 %v84
    %v284 = vunpack.c.l.b16 %v85
    %v285 = vunpack.c.l.b16 %v86
    %v286 = vunpack.c.l.b16 %v87
    %v287 = vunpack.c.l.b16 %v88
    %v288 = vunpack.c.l.b16 %v89
    %v289 = vunpack.c.l.b16 %v90
    %v290 = vunpack.c.l.b16 %v91
    %v291 = vunpack.c.l.b16 %v92
    %v292 = vunpack.c.l.b16 %v93
    %v293 = vunpack.c.l.b16 %v94
    %v294 = vunpack.c.l.b16 %v95
    %v295 = vunpack.c.l.b16 %v96
    %v296 = vunpack.c.l.b16 %v97
    %v297 = vunpack.c.l.b16 %v98
    %v298 = vunpack.c.l.b16 %v99
    %v299 = vunpack.c.l.b16 %v100
    %v300 = vunpack.c.l.b16 %v101
    %v301 = vunpack.c.l.b16 %v102
    %v302 = vunpack.c.l.b16 %v103
    %v303 = vunpack.c.l.b16 %v104
    %v304 = vunpack.c.l.b16 %v105
    %v305 = vunpack.c.l.b16 %v106
    %v306 = vunpack.c.l.b16 %v107
    %v307 = vunpack.c.l.b16 %v108
    %v308 = vunpack.c.l.b16 %v109
    %v309 = vunpack.c.l.b16 %v110
    %v310 = vunpack.c.l.b16 %v111
    %v311 = vunpack.c.l.b16 %v112
    %v312 = vunpack.c.l.b16 %v113
    %v313 = vunpack.c.l.b16 %v114
    %v314 = vunpack.c.l.b16 %v115
    %v315 = vunpack.c.l.b16 %v116
    %v316 = vunpack.c.l.b16 %v117
    %v317 = vunpack.c.l.b16 %v118
    %v318 = vunpack.c.l.b16 %v119
    %v319 = vunpack.c.l.b16 %v120
    %v320 = vunpack.c.l.b16 %v121
    %v321 = vunpack.c.l.b16 %v122
    %v322 = vunpack.c.l.b16 %v123
    %v323 = vunpack.c.l.b16 %v124
    %v324 = vunpack.c.l.b16 %v125
    %v325 = vunpack.c.l.b16 %v126
    %v326 = vunpack.c.l.b16 %v127
    %v327 = vunpack.c.l.b16 %v128
    %v328 = vunpack.c.l.b16 %v129
    %v329 = vunpack.c.l.b16 %v130
    %v330 = vunpack.c.l.b16 %v131
    %v331 = vunpack.c.l.b16 %v132
    %v332 = vunpack.c.l.b16 %v133
    %v333 = vunpack.c.l.b16 %v134
    %v334 = vunpack.c.l.b16 %v135
    %v335 = vunpack.c.l.b16 %v136
    %v336 = vunpack.c.l.b16 %v137
    %v337 = vunpack.c.l.b16 %v138
    %v338 = vunpack.c.l.b16 %v139
    %v339 = vunpack.c.l.b16 %v140
    %v340 = vunpack.c.l.b16 %v141
    %v341 = vunpack.c.l.b16 %v142
    %v342 = vpack.c.b16 %v247, %v246
    %v343 = vpack.c.b16 %v249, %v248
    %v344 = vpack.c.b16 %v251, %v250
    %v345 = vpack.c.b16 %v253, %v252
    %v346 = vpack.c.b16 %v255, %v254
    %v347 = vpack.c.b16 %v257, %v256
    %v348 = vpack.c.b16 %v259, %v258
    %v349 = vpack.c.b16 %v261, %v260
    %v350 = vpack.c.b16 %v263, %v262
    %v351 = vpack.c.b16 %v265, %v264
    %v352 = vpack.c.b16 %v267, %v266
    %v353 = vpack.c.b16 %v269, %v268
    %v354 = vpack.c.b16 %v271, %v270
    %v355 = vpack.c.b16 %v273, %v272
    %v356 = vpack.c.b16 %v275, %v274
    %v357 = vpack.c.b16 %v277, %v276
    %v358 = vpack.c.b16 %v279, %v278
    %v359 = vpack.c.b16 %v281, %v280
    %v360 = vpack.c.b16 %v283, %v282
    %v361 = vpack.c.b16 %v285, %v284
    %v362 = vpack.c.b16 %v287, %v286
    %v363 = vpack.c.b16 %v289, %v288
    %v364 = vpack.c.b16 %v291, %v290
    %v365 = vpack.c.b16 %v293, %v292
    %v366 = vpack.c.b16 %v295, %v294
    %v367 = vpack.c.b16 %v297, %v296
    %v368 = vpack.c.b16 %v299, %v298
    %v369 = vpack.c.b16 %v301, %v300
    %v370 = vpack.c.b16 %v303, %v302
    %v371 = vpack.c.b16 %v305, %v304
    %v372 = vpack.c.b16 %v307, %v306
    %v373 = vpack.c.b16 %v309, %v308
    %v374 = vpack.c.b16 %v311, %v310
    %v375 = vpack.c.b16 %v313, %v312
    %v376 = vpack.c.b16 %v315, %v314
    %v377 = vpack.c.b16 %v317, %v316
    %v378 = vpack.c.b16 %v319, %v318
    %v379 = vpack.c.b16 %v321, %v320
    %v380 = vpack.c.b16 %v323, %v322
    %v381 = vpack.c.b16 %v325, %v324
    %v382 = vpack.c.b16 %v327, %v326
    %v383 = vpack.c.b16 %v329, %v328
    %v384 = vpack.c.b16 %v331, %v330
    %v385 = vpack.c.b16 %v333, %v332
    %v386 = vpack.c.b16 %v335, %v334
    %v387 = vpack.c.b16 %v337, %v336
    %v388 = vpack.c.b16 %v339, %v338
    %v389 = vpack.c.b16 %v341, %v340
    %438 = vmatprep.subr.bf16.mxu0 0
    %439 = vmatpush1.bf16.msra.mxu0 %v349
    %440 = vmatprep.subr.bf16.mxu0 0
    %441 = vmatpush1.bf16.msra.mxu0 %v348
    %442 = vmatprep.subr.bf16.mxu0 0
    %443 = vmatpush1.bf16.msra.mxu0 %v347
    %444 = vmatprep.subr.bf16.mxu0 0
    %445 = vmatpush1.bf16.msra.mxu0 %v346
    %446 = vmatprep.subr.bf16.mxu0 0
    %447 = vmatpush1.bf16.msra.mxu0 %v345
    %448 = vmatprep.subr.bf16.mxu0 0
    %449 = vmatpush1.bf16.msra.mxu0 %v344
    %450 = vmatprep.subr.bf16.mxu0 0
    %451 = vmatpush1.bf16.msra.mxu0 %v343
    %452 = vmatprep.subr.bf16.mxu0 0
    %453 = vmatpush1.bf16.msra.mxu0 %v342
    %454 = vmatprep.subr.bf16.mxu0 0
    %455 = vmatpush2.bf16.msra.mxu0 %v357
    %456 = vmatprep.subr.bf16.mxu0 0
    %457 = vmatpush2.bf16.msra.mxu0 %v356
    %458 = vmatprep.subr.bf16.mxu0 0
    %459 = vmatpush2.bf16.msra.mxu0 %v355
    %460 = vmatprep.subr.bf16.mxu0 0
    %461 = vmatpush2.bf16.msra.mxu0 %v354
    %462 = vmatprep.subr.bf16.mxu0 0
    %463 = vmatpush2.bf16.msra.mxu0 %v353
    %464 = vmatprep.subr.bf16.mxu0 0
    %465 = vmatpush2.bf16.msra.mxu0 %v352
    %466 = vmatprep.subr.bf16.mxu0 0
    %467 = vmatpush2.bf16.msra.mxu0 %v351
    %468 = vmatprep.subr.bf16.mxu0 0
    %469 = vmatpush2.bf16.msra.mxu0 %v350
    %470 = vmatprep.mubr.bf16.mxu0 %v42
    %471 = vmatmul.mubr.bf16.gmra.mxu0 %v41
    %v472 = vpop.f32.mrf.mxu0
    %v473 = vadd.f32 %v148, %v472
    %v474 = vpop.f32.mrf.mxu0
    %v475 = vpop.f32.mrf.mxu0
    %v476 = vpop.f32.mrf.mxu0
    %477 = vdwg.mxu0
    %478 = vmatprep.subr.bf16.mxu0 0
    %479 = vmatpush1.bf16.msra.mxu0 %v365
    %480 = vmatprep.subr.bf16.mxu0 0
    %481 = vmatpush1.bf16.msra.mxu0 %v364
    %482 = vmatprep.subr.bf16.mxu0 0
    %483 = vmatpush1.bf16.msra.mxu0 %v363
    %484 = vmatprep.subr.bf16.mxu0 0
    %485 = vmatpush1.bf16.msra.mxu0 %v362
    %486 = vmatprep.subr.bf16.mxu0 0
    %487 = vmatpush1.bf16.msra.mxu0 %v361
    %488 = vmatprep.subr.bf16.mxu0 0
    %489 = vmatpush1.bf16.msra.mxu0 %v360
    %490 = vmatprep.subr.bf16.mxu0 0
    %491 = vmatpush1.bf16.msra.mxu0 %v359
    %492 = vmatprep.subr.bf16.mxu0 0
    %493 = vmatpush1.bf16.msra.mxu0 %v358
    %494 = vmatprep.subr.bf16.mxu0 0
    %495 = vmatpush2.bf16.msra.mxu0 %v373
    %496 = vmatprep.subr.bf16.mxu0 0
    %497 = vmatpush2.bf16.msra.mxu0 %v372
    %498 = vmatprep.subr.bf16.mxu0 0
    %499 = vmatpush2.bf16.msra.mxu0 %v371
    %500 = vmatprep.subr.bf16.mxu0 0
    %501 = vmatpush2.bf16.msra.mxu0 %v370
    %502 = vmatprep.subr.bf16.mxu0 0
    %503 = vmatpush2.bf16.msra.mxu0 %v369
    %504 = vmatprep.subr.bf16.mxu0 0
    %505 = vmatpush2.bf16.msra.mxu0 %v368
    %506 = vmatprep.subr.bf16.mxu0 0
    %507 = vmatpush2.bf16.msra.mxu0 %v367
    %508 = vmatprep.subr.bf16.mxu0 0
    %509 = vmatpush2.bf16.msra.mxu0 %v366
    %510 = vmatprep.mubr.bf16.mxu0 %v44
    %511 = vmatmul.mubr.bf16.gmra.mxu0 %v43
    %v512 = vpop.f32.mrf.mxu0
    %v513 = vadd.f32 %v473, %v512
    %v514 = vpop.f32.mrf.mxu0
    %v515 = vpop.f32.mrf.mxu0
    %v516 = vpop.f32.mrf.mxu0
    %517 = vdwg.mxu0
    %518 = vmatprep.subr.bf16.mxu0 0
    %519 = vmatpush1.bf16.msra.mxu0 %v381
    %520 = vmatprep.subr.bf16.mxu0 0
    %521 = vmatpush1.bf16.msra.mxu0 %v380
    %522 = vmatprep.subr.bf16.mxu0 0
    %523 = vmatpush1.bf16.msra.mxu0 %v379
    %524 = vmatprep.subr.bf16.mxu0 0
    %525 = vmatpush1.bf16.msra.mxu0 %v378
    %526 = vmatprep.subr.bf16.mxu0 0
    %527 = vmatpush1.bf16.msra.mxu0 %v377
    %528 = vmatprep.subr.bf16.mxu0 0
    %529 = vmatpush1.bf16.msra.mxu0 %v376
    %530 = vmatprep.subr.bf16.mxu0 0
    %531 = vmatpush1.bf16.msra.mxu0 %v375
    %532 = vmatprep.subr.bf16.mxu0 0
    %533 = vmatpush1.bf16.msra.mxu0 %v374
    %534 = vmatprep.subr.bf16.mxu0 0
    %535 = vmatpush2.bf16.msra.mxu0 %v389
    %536 = vmatprep.subr.bf16.mxu0 0
    %537 = vmatpush2.bf16.msra.mxu0 %v388
    %538 = vmatprep.subr.bf16.mxu0 0
    %539 = vmatpush2.bf16.msra.mxu0 %v387
    %540 = vmatprep.subr.bf16.mxu0 0
    %541 = vmatpush2.bf16.msra.mxu0 %v386
    %542 = vmatprep.subr.bf16.mxu0 0
    %543 = vmatpush2.bf16.msra.mxu0 %v385
    %544 = vmatprep.subr.bf16.mxu0 0
    %545 = vmatpush2.bf16.msra.mxu0 %v384
    %546 = vmatprep.subr.bf16.mxu0 0
    %547 = vmatpush2.bf16.msra.mxu0 %v383
    %548 = vmatprep.subr.bf16.mxu0 0
    %549 = vmatpush2.bf16.msra.mxu0 %v382
    %550 = vmatprep.mubr.bf16.mxu0 %v46
    %551 = vmatmul.mubr.bf16.gmra.mxu0 %v45
    %v552 = vpop.f32.mrf.mxu0
    %v553 = vadd.f32 %v513, %v552
    %v554 = vpop.f32.mrf.mxu0
    %v555 = vpop.f32.mrf.mxu0
    %v556 = vpop.f32.mrf.mxu0
    %557 = vdwg.mxu0
    %v558 = vmax.f32 %v553, 0.0
    %v559 = vpack.c.bf16 %v558, %v558
    %v560 = vld [vmem:[%s3] sm:$0xf]
    %v561 = vld [vmem:[%s3 + $0x4] sm:$0xf]
    %v562 = vld [vmem:[%s3 + $0x8] sm:$0xf]
    %v563 = vld [vmem:[%s3 + $0xc] sm:$0xf]
    %v564 = vld [vmem:[%s3 + $0x10] sm:$0xf]
    %v565 = vld [vmem:[%s3 + $0x14] sm:$0xf]
    %v566 = vld [vmem:[%s3 + $0x18] sm:$0xf]
    %v567 = vld [vmem:[%s3 + $0x1c] sm:$0xf]
    %v568 = vld [vmem:[%s3 + $0x20] sm:$0xf]
    %v569 = vld [vmem:[%s3 + $0x24] sm:$0xf]
    %v570 = vld [vmem:[%s3 + $0x28] sm:$0xf]
    %v571 = vld [vmem:[%s3 + $0x2c] sm:$0xf]
    %v572 = vld [vmem:[%s3 + $0x30] sm:$0xf]
    %v573 = vld [vmem:[%s3 + $0x34] sm:$0xf]
    %v574 = vld [vmem:[%s3 + $0x38] sm:$0xf]
    %v575 = vld [vmem:[%s3 + $0x3c] sm:$0xf]
    %v576 = vld [vmem:[%s4] sm:$0x1]
    %v578 = vlaneseq
    %v579 = vshrl.u32 %v578, 7
    %v580 = vsub.s32 0, %v579
    %v581 = vrot.slane %v576, %v580
    %v599 = vunpack.c.l.b16 %v560
    %v600 = vunpack.c.l.b16 %v561
    %v601 = vunpack.c.l.b16 %v562
    %v602 = vunpack.c.l.b16 %v563
    %v603 = vunpack.c.l.b16 %v564
    %v604 = vunpack.c.l.b16 %v565
    %v605 = vunpack.c.l.b16 %v566
    %v606 = vunpack.c.l.b16 %v567
    %v607 = vunpack.c.l.b16 %v568
    %v608 = vunpack.c.l.b16 %v569
    %v609 = vunpack.c.l.b16 %v570
    %v610 = vunpack.c.l.b16 %v571
    %v611 = vunpack.c.l.b16 %v572
    %v612 = vunpack.c.l.b16 %v573
    %v613 = vunpack.c.l.b16 %v574
    %v614 = vunpack.c.l.b16 %v575
    %v615 = vpack.c.b16 %v600, %v599
    %v616 = vpack.c.b16 %v602, %v601
    %v617 = vpack.c.b16 %v604, %v603
    %v618 = vpack.c.b16 %v606, %v605
    %v619 = vpack.c.b16 %v608, %v607
    %v620 = vpack.c.b16 %v610, %v609
    %v621 = vpack.c.b16 %v612, %v611
    %v622 = vpack.c.b16 %v614, %v613
    %631 = vmatprep.subr.bf16.mxu0 0
    %632 = vmatpush1.bf16.msra.mxu0 %v622
    %633 = vmatprep.subr.bf16.mxu0 0
    %634 = vmatpush1.bf16.msra.mxu0 %v621
    %635 = vmatprep.subr.bf16.mxu0 0
    %636 = vmatpush1.bf16.msra.mxu0 %v620
    %637 = vmatprep.subr.bf16.mxu0 0
    %638 = vmatpush1.bf16.msra.mxu0 %v619
    %639 = vmatprep.subr.bf16.mxu0 0
    %640 = vmatpush1.bf16.msra.mxu0 %v618
    %641 = vmatprep.subr.bf16.mxu0 0
    %642 = vmatpush1.bf16.msra.mxu0 %v617
    %643 = vmatprep.subr.bf16.mxu0 0
    %644 = vmatpush1.bf16.msra.mxu0 %v616
    %645 = vmatprep.subr.bf16.mxu0 0
    %646 = vmatpush1.bf16.msra.mxu0 %v615
    %647 = vmatprep.subr.bf16.mxu0 0
    %648 = vmatpush2.bf16.msra.mxu0 0
    %649 = vmatprep.subr.bf16.mxu0 0
    %650 = vmatpush2.bf16.msra.mxu0 0
    %651 = vmatprep.subr.bf16.mxu0 0
    %652 = vmatpush2.bf16.msra.mxu0 0
    %653 = vmatprep.subr.bf16.mxu0 0
    %654 = vmatpush2.bf16.msra.mxu0 0
    %655 = vmatprep.subr.bf16.mxu0 0
    %656 = vmatpush2.bf16.msra.mxu0 0
    %657 = vmatprep.subr.bf16.mxu0 0
    %658 = vmatpush2.bf16.msra.mxu0 0
    %659 = vmatprep.subr.bf16.mxu0 0
    %660 = vmatpush2.bf16.msra.mxu0 0
    %661 = vmatprep.subr.bf16.mxu0 0
    %662 = vmatpush2.bf16.msra.mxu0 0
    %663 = vmatprep.mubr.bf16.mxu0 0
    %664 = vmatmul.mubr.bf16.gmra.mxu0 %v559
    %v665 = vpop.f32.mrf.mxu0
    %v666 = vadd.f32 %v581, %v665
    %v667 = vpop.f32.mrf.mxu0
    %v668 = vpop.f32.mrf.mxu0
    %v669 = vpop.f32.mrf.mxu0
    %670 = vdwg.mxu0
    %671 = vst [vmem:[%s5] sm:$0xff] %v666
    // Predicated region
    $region26: #{personality_encoder_core.1} parent=1 // pred_check
      _
    $region27: #{personality_encoder_core.1} parent=1 // pred_check_branch
      %673 = sbr.rel (0) target = $region29
    $region28: #{personality_encoder_core.1} parent=1 // pred_region
      _
    $region29: #{personality_encoder_core.1} parent=1 // pred_fallthru
      _
    // Predicated region
    $region30: #{personality_encoder_core.1} parent=1 // pred_check
      _
    $region31: #{personality_encoder_core.1} parent=1 // pred_check_branch
      %675 = sbr.rel (0) target = $region33
    $region32: #{personality_encoder_core.1} parent=1 // pred_region
      _
    $region33: #{personality_encoder_core.1} parent=1 // pred_fallthru
      _
    %676 = vsyncpa [#allocation3], 1

</llo_original>
